<compile_context>
chip_gen: v7x
topology: tpu7x:2x2x1
jax: 0.10.0
libtpu: 0.0.40
codegen_flags: <defaults>
</compile_context>

<pallas_src>
import jax
import jax.numpy as jnp
from jax.experimental import pallas as pl
from jax.experimental.pallas import tpu as pltpu

_LANE = 128
_SUBLANE = 8


def _roundup(x, m):
    return ((x + m - 1) // m) * m


def attention_block_kernel(zf_ref, w1b_ref, b1t_ref, w2b_ref, out_ref, beta_ref):
    # zf_ref : (bb, S*D)  lane-dense z slab (native dtype)
    # w1b_ref: (S*D, S*H) block-diagonal first-layer weight
    # b1t_ref: (1, S*H)   first-layer bias tiled S times
    # w2b_ref: (S*H, S)   block-diagonal second-layer weight
    # out_ref: (bb, D), beta_ref: (bb, S)
    s = beta_ref.shape[1]
    d = out_ref.shape[1]

    zf = zf_ref[...]                                     # (bb, S*D), native dtype

    # ---- Linear(D->H) + Tanh for all S tokens in ONE lane-dense MXU matmul ----
    h = jnp.tanh(
        jnp.dot(zf, w1b_ref[...], preferred_element_type=jnp.float32)
        + b1t_ref[...].astype(jnp.float32)
    )                                                    # (bb, S*H) f32

    # ---- Linear(H->1, no bias): block-diagonal (S*H, S) matmul -> per-token logits ----
    logits = jnp.dot(h, w2b_ref[...].astype(jnp.float32),
                     preferred_element_type=jnp.float32)  # (bb, S) f32

    # ---- softmax over the token axis S (PyTorch dim=1), f32 math ----
    m = jnp.max(logits, axis=-1, keepdims=True)
    e = jnp.exp(logits - m)
    denom = jnp.sum(e, axis=-1, keepdims=True)
    r = pl.reciprocal(denom, approx=True)                # EUP slot
    r = r * (2.0 - denom * r)                            # one Newton step -> ~f32 accuracy
    beta = e * r                                         # (bb, S) f32

    beta_ref[...] = beta.astype(beta_ref.dtype)          # lane-dense (bb, S) store

    # ---- weighted sum over S on the VPU/XLU, f32 accumulation (no batched MXU einsum) ----
    zf32 = zf.astype(jnp.float32)
    acc = beta[:, 0:1] * zf32[:, 0:d]                    # (bb, D) f32
    for si in range(1, s):
        acc = acc + beta[:, si:si + 1] * zf32[:, si * d:(si + 1) * d]
    out_ref[...] = acc.astype(out_ref.dtype)


def attention_block(z, w1, b1, w2, *, block_b=None):
    """z: (B, S, D); w1: (D, H); b1: (1, H); w2: (H, 1).

    Returns (out, beta) with out: (B, D), beta: (B, S, 1), matching the PyTorch
    AttentionBlock.forward semantics.
    """
    B, S, D = z.shape
    H = w1.shape[1]
    assert w1.shape == (D, H) and b1.shape == (1, H) and w2.shape == (H, 1)

    dt = z.dtype
    itemsize = jnp.dtype(dt).itemsize

    # Lane-fused layout: contiguous reshape is free; lane index = s*D + d.
    z_flat = z.reshape(B, S * D)

    # Fused block-diagonal weights (tiny: (S*D, S*H) etc.), built once per call.
    w1b = jnp.kron(jnp.eye(S, dtype=w1.dtype), w1)                        # (S*D, S*H)
    b1t = jnp.tile(b1, (1, S)).astype(jnp.float32)                        # (1, S*H)
    w2b = jnp.kron(jnp.eye(S, dtype=w2.dtype), w2).astype(jnp.float32)    # (S*H, S)

    # ---- bytes-based, lane-padding-aware block sizing ----
    row_z = _roundup(S * D, _LANE) * itemsize     # z bytes / batch row as laid out in VMEM
    row_f32 = _roundup(S * D, _LANE) * 4          # f32 temporaries (z upcast, products)
    row_h = _roundup(S * H, _LANE) * 4            # tanh activations
    row_out = 2 * _LANE * 4                       # out + beta block rows (lane padded)
    per_row_live = 2 * row_z + 2 * row_f32 + row_h + 2 * row_out   # dbl-buffered z + temps

    if block_b is None:
        target_z_bytes = 2 * 1024 * 1024          # >= ~2 MiB of z per step (HBM roofline)
        vmem_budget = 12 * 1024 * 1024            # stay under v5e's 16 MiB scoped default
        block_b = max(1, target_z_bytes // row_z)
        block_b = min(block_b, max(1, vmem_budget // per_row_live))
        # v7x: if the whole batch would otherwise be a single step but each half still
        # carries >= ~1 MiB of z, split into two balanced steps so both TensorCores get
        # work (negligible cost on single-TC v5e/v6e at that size).
        min_rows = max(1, (1024 * 1024) // row_z)
        if B <= block_b and B >= 2 * min_rows:
            block_b = pl.cdiv(B, 2)
    block_b = int(max(1, min(int(block_b), B)))

    # Mosaic constraint for the 2-D z slab: the sublane (batch) block dim must be a
    # multiple of 8 unless it spans the full array.
    if block_b < B:
        block_b = min(_roundup(block_b, _SUBLANE), B)
    if block_b < B:
        grid_b = pl.cdiv(B, block_b)
        # Balance the steps (even work per step; the last block may run past B — Pallas
        # drops out-of-bounds rows, so no jnp.pad copy of z is ever made).
        block_b = min(_roundup(pl.cdiv(B, grid_b), _SUBLANE), B)
        grid_b = pl.cdiv(B, block_b)
    else:
        block_b = B
        grid_b = 1

    out_shape = (
        jax.ShapeDtypeStruct((B, D), dt),
        jax.ShapeDtypeStruct((B, S), dt),    # lane-dense beta (reshaped below)
    )

    out, beta = pl.pallas_call(
        attention_block_kernel,
        out_shape=out_shape,
        grid_spec=pltpu.PrefetchScalarGridSpec(
            num_scalar_prefetch=0,
            grid=(grid_b,),
            in_specs=[
                pl.BlockSpec((block_b, S * D), lambda b: (b, 0)),
                pl.BlockSpec((S * D, S * H), lambda b: (0, 0)),
                pl.BlockSpec((1, S * H), lambda b: (0, 0)),
                pl.BlockSpec((S * H, S), lambda b: (0, 0)),
            ],
            out_specs=(
                pl.BlockSpec((block_b, D), lambda b: (b, 0)),
                pl.BlockSpec((block_b, S), lambda b: (b, 0)),
            ),
        ),
        compiler_params=pltpu.CompilerParams(
            dimension_semantics=("parallel",),
            vmem_limit_bytes=32 * 1024 * 1024,
        ),
    )(z_flat, w1b, b1t, w2b)

    return out, beta.reshape(B, S, 1)


def attention_block_ref(z, w1, b1, w2):
    """Pure-JAX reference mirroring the PyTorch forward."""
    w = jnp.tanh(z @ w1 + b1) @ w2            # (B, S, 1)
    beta = jax.nn.softmax(w, axis=1)          # softmax over dim=1
    return (beta * z).sum(axis=1), beta


if __name__ == "__main__":
    S, D, H = 8, 32, 16   # tokens/views, in_size, hidden_size

    key = jax.random.PRNGKey(0)
    kz, kw1, kb1, kw2 = jax.random.split(key, 4)

    def bf16_exact(x):
        # Round test data to bf16-representable values so the correctness check is
        # independent of whether the TPU's default f32 matmul precision truncates
        # matmul inputs to bf16 (kernel and reference then differ only by f32
        # accumulation order / transcendental rounding).
        return x.astype(jnp.bfloat16).astype(jnp.float32)

    # Deterministic synthetic parameters (shapes from nn.Linear(in_size, hidden),
    # nn.Linear(hidden, 1, bias=False)).
    w1 = bf16_exact(jax.random.normal(kw1, (D, H), dtype=jnp.float32) * 0.1)
    b1 = bf16_exact(jax.random.normal(kb1, (1, H), dtype=jnp.float32) * 0.1)
    w2 = bf16_exact(jax.random.normal(kw2, (H, 1), dtype=jnp.float32) * 0.1)

    cases = [
        dict(B=2, block_b=None),    # base case, single grid step
        dict(B=16, block_b=None),   # larger batch, still one block
        dict(B=5, block_b=None),    # batch not a multiple of 8 (full-array block)
        dict(B=20, block_b=8),      # multi-step grid + ragged last block (3*8 > 20)
    ]
    for c in cases:
        B = c["B"]
        z = bf16_exact(
            jax.random.normal(jax.random.fold_in(kz, B), (B, S, D), dtype=jnp.float32)
        )

        out, beta = attention_block(z, w1, b1, w2, block_b=c["block_b"])
        jax.block_until_ready((out, beta))

        out_ref, beta_ref = attention_block_ref(z, w1, b1, w2)
        assert out.shape == (B, D) and beta.shape == (B, S, 1)
        assert jnp.allclose(out, out_ref, atol=1e-4, rtol=1e-4)
        assert jnp.allclose(beta, beta_ref, atol=1e-4, rtol=1e-4)

    print("KERNEL_OK")
</pallas_src>

<mosaic_0001>
module attributes {stable_mosaic.version = 11 : i64} {
  func.func @attention_block_kernel(%arg0: i32, %arg1: memref<2x256xf32, #tpu.memory_space<vmem>>, %arg2: memref<256x128xf32, #tpu.memory_space<vmem>>, %arg3: memref<1x128xf32, #tpu.memory_space<vmem>>, %arg4: memref<128x8xf32, #tpu.memory_space<vmem>>, %arg5: memref<2x32xf32, #tpu.memory_space<vmem>>, %arg6: memref<2x8xf32, #tpu.memory_space<vmem>>) attributes {dimension_semantics = [#tpu.dimension_semantics<parallel>], iteration_bounds = array<i64: 1>, scalar_prefetch = 0 : i64, scratch_operands = 0 : i64, tpu.core_type = #tpu.core_type<tc>, window_params = [{transform_indices = @transform_0, window_bounds = array<i64: 2, 256>}, {pipeline_mode = #tpu.pipeline_mode<synchronous>, transform_indices = @transform_1, window_bounds = array<i64: 256, 128>}, {pipeline_mode = #tpu.pipeline_mode<synchronous>, transform_indices = @transform_2, window_bounds = array<i64: 1, 128>}, {pipeline_mode = #tpu.pipeline_mode<synchronous>, transform_indices = @transform_3, window_bounds = array<i64: 128, 8>}, {transform_indices = @transform_4, window_bounds = array<i64: 2, 32>}, {transform_indices = @transform_5, window_bounds = array<i64: 2, 8>}]} {
    %c0 = arith.constant 0 : index
    %c0_0 = arith.constant 0 : index
    %0 = vector.load %arg1[%c0, %c0_0] : memref<2x256xf32, #tpu.memory_space<vmem>>, vector<2x256xf32>
    %c0_1 = arith.constant 0 : index
    %c0_2 = arith.constant 0 : index
    %1 = vector.load %arg2[%c0_1, %c0_2] : memref<256x128xf32, #tpu.memory_space<vmem>>, vector<256x128xf32>
    %cst = arith.constant dense<0.000000e+00> : vector<2x128xf32>
    %2 = tpu.matmul %0, %1, %cst {dimension_numbers = #tpu.dot_dimension_numbers<[1], [0], [0], [1], [0, 0, 1, 1], [], []>} : vector<2x256xf32>, vector<256x128xf32>, vector<2x128xf32> -> vector<2x128xf32>
    %c0_3 = arith.constant 0 : index
    %c0_4 = arith.constant 0 : index
    %3 = vector.load %arg3[%c0_3, %c0_4] : memref<1x128xf32, #tpu.memory_space<vmem>>, vector<1x128xf32>
    %4 = vector.broadcast %3 : vector<1x128xf32> to vector<2x128xf32>
    %5 = arith.addf %2, %4 : vector<2x128xf32>
    %6 = math.tanh %5 : vector<2x128xf32>
    %c0_5 = arith.constant 0 : index
    %c0_6 = arith.constant 0 : index
    %7 = vector.load %arg4[%c0_5, %c0_6] : memref<128x8xf32, #tpu.memory_space<vmem>>, vector<128x8xf32>
    %cst_7 = arith.constant dense<0.000000e+00> : vector<2x8xf32>
    %8 = tpu.matmul %6, %7, %cst_7 {dimension_numbers = #tpu.dot_dimension_numbers<[1], [0], [0], [1], [0, 0, 1, 1], [], []>} : vector<2x128xf32>, vector<128x8xf32>, vector<2x8xf32> -> vector<2x8xf32>
    %cst_8 = arith.constant dense<0xFF800000> : vector<2xf32>
    %9 = vector.multi_reduction <maximumf>, %8, %cst_8 [1] : vector<2x8xf32> to vector<2xf32>
    %10 = vector.shape_cast %9 : vector<2xf32> to vector<2x1xf32>
    %11 = vector.broadcast %10 : vector<2x1xf32> to vector<2x8xf32>
    %12 = arith.subf %8, %11 : vector<2x8xf32>
    %13 = math.exp %12 : vector<2x8xf32>
    %cst_9 = arith.constant dense<0.000000e+00> : vector<2xf32>
    %14 = vector.multi_reduction <add>, %13, %cst_9 [1] : vector<2x8xf32> to vector<2xf32>
    %15 = vector.shape_cast %14 : vector<2xf32> to vector<2x1xf32>
    %16 = tpu.reciprocal %15 {approx = true} : vector<2x1xf32> -> vector<2x1xf32>
    %17 = arith.mulf %15, %16 : vector<2x1xf32>
    %cst_10 = arith.constant 2.000000e+00 : f32
    %18 = vector.broadcast %cst_10 : f32 to vector<2x1xf32>
    %19 = arith.subf %18, %17 : vector<2x1xf32>
    %20 = arith.mulf %16, %19 : vector<2x1xf32>
    %21 = vector.broadcast %20 : vector<2x1xf32> to vector<2x8xf32>
    %22 = arith.mulf %13, %21 : vector<2x8xf32>
    %c0_11 = arith.constant 0 : index
    %c0_12 = arith.constant 0 : index
    %23 = vector.load %arg6[%c0_11, %c0_12] : memref<2x8xf32, #tpu.memory_space<vmem>>, vector<2x8xf32>
    tpu.vector_store %arg6[%c0_11, %c0_12], %22 {strides = array<i32>} : memref<2x8xf32, #tpu.memory_space<vmem>>, vector<2x8xf32>,
    %24 = vector.extract_strided_slice %22 {offsets = [0, 0], sizes = [2, 1], strides = [1, 1]} : vector<2x8xf32> to vector<2x1xf32>
    %25 = vector.extract_strided_slice %0 {offsets = [0, 0], sizes = [2, 32], strides = [1, 1]} : vector<2x256xf32> to vector<2x32xf32>
    %26 = vector.broadcast %24 : vector<2x1xf32> to vector<2x32xf32>
    %27 = arith.mulf %26, %25 : vector<2x32xf32>
    %28 = vector.extract_strided_slice %22 {offsets = [0, 1], sizes = [2, 1], strides = [1, 1]} : vector<2x8xf32> to vector<2x1xf32>
    %29 = vector.extract_strided_slice %0 {offsets = [0, 32], sizes = [2, 32], strides = [1, 1]} : vector<2x256xf32> to vector<2x32xf32>
    %30 = vector.broadcast %28 : vector<2x1xf32> to vector<2x32xf32>
    %31 = arith.mulf %30, %29 : vector<2x32xf32>
    %32 = arith.addf %27, %31 : vector<2x32xf32>
    %33 = vector.extract_strided_slice %22 {offsets = [0, 2], sizes = [2, 1], strides = [1, 1]} : vector<2x8xf32> to vector<2x1xf32>
    %34 = vector.extract_strided_slice %0 {offsets = [0, 64], sizes = [2, 32], strides = [1, 1]} : vector<2x256xf32> to vector<2x32xf32>
    %35 = vector.broadcast %33 : vector<2x1xf32> to vector<2x32xf32>
    %36 = arith.mulf %35, %34 : vector<2x32xf32>
    %37 = arith.addf %32, %36 : vector<2x32xf32>
    %38 = vector.extract_strided_slice %22 {offsets = [0, 3], sizes = [2, 1], strides = [1, 1]} : vector<2x8xf32> to vector<2x1xf32>
    %39 = vector.extract_strided_slice %0 {offsets = [0, 96], sizes = [2, 32], strides = [1, 1]} : vector<2x256xf32> to vector<2x32xf32>
    %40 = vector.broadcast %38 : vector<2x1xf32> to vector<2x32xf32>
    %41 = arith.mulf %40, %39 : vector<2x32xf32>
    %42 = arith.addf %37, %41 : vector<2x32xf32>
    %43 = vector.extract_strided_slice %22 {offsets = [0, 4], sizes = [2, 1], strides = [1, 1]} : vector<2x8xf32> to vector<2x1xf32>
    %44 = vector.extract_strided_slice %0 {offsets = [0, 128], sizes = [2, 32], strides = [1, 1]} : vector<2x256xf32> to vector<2x32xf32>
    %45 = vector.broadcast %43 : vector<2x1xf32> to vector<2x32xf32>
    %46 = arith.mulf %45, %44 : vector<2x32xf32>
    %47 = arith.addf %42, %46 : vector<2x32xf32>
    %48 = vector.extract_strided_slice %22 {offsets = [0, 5], sizes = [2, 1], strides = [1, 1]} : vector<2x8xf32> to vector<2x1xf32>
    %49 = vector.extract_strided_slice %0 {offsets = [0, 160], sizes = [2, 32], strides = [1, 1]} : vector<2x256xf32> to vector<2x32xf32>
    %50 = vector.broadcast %48 : vector<2x1xf32> to vector<2x32xf32>
    %51 = arith.mulf %50, %49 : vector<2x32xf32>
    %52 = arith.addf %47, %51 : vector<2x32xf32>
    %53 = vector.extract_strided_slice %22 {offsets = [0, 6], sizes = [2, 1], strides = [1, 1]} : vector<2x8xf32> to vector<2x1xf32>
    %54 = vector.extract_strided_slice %0 {offsets = [0, 192], sizes = [2, 32], strides = [1, 1]} : vector<2x256xf32> to vector<2x32xf32>
    %55 = vector.broadcast %53 : vector<2x1xf32> to vector<2x32xf32>
    %56 = arith.mulf %55, %54 : vector<2x32xf32>
    %57 = arith.addf %52, %56 : vector<2x32xf32>
    %58 = vector.extract_strided_slice %22 {offsets = [0, 7], sizes = [2, 1], strides = [1, 1]} : vector<2x8xf32> to vector<2x1xf32>
    %59 = vector.extract_strided_slice %0 {offsets = [0, 224], sizes = [2, 32], strides = [1, 1]} : vector<2x256xf32> to vector<2x32xf32>
    %60 = vector.broadcast %58 : vector<2x1xf32> to vector<2x32xf32>
    %61 = arith.mulf %60, %59 : vector<2x32xf32>
    %62 = arith.addf %57, %61 : vector<2x32xf32>
    %c0_13 = arith.constant 0 : index
    %c0_14 = arith.constant 0 : index
    %63 = vector.load %arg5[%c0_13, %c0_14] : memref<2x32xf32, #tpu.memory_space<vmem>>, vector<2x32xf32>
    tpu.vector_store %arg5[%c0_13, %c0_14], %62 {strides = array<i32>} : memref<2x32xf32, #tpu.memory_space<vmem>>, vector<2x32xf32>,
    return
  }
  func.func @transform_0(%arg0: i32) -> (i32, i32) {
    %c0_i32 = arith.constant 0 : i32
    %c0_i32_0 = arith.constant 0 : i32
    return %arg0, %c0_i32 : i32, i32
  }
  func.func @transform_1(%arg0: i32) -> (i32, i32) {
    %c0_i32 = arith.constant 0 : i32
    %c0_i32_0 = arith.constant 0 : i32
    %c0_i32_1 = arith.constant 0 : i32
    return %c0_i32, %c0_i32_0 : i32, i32
  }
  func.func @transform_2(%arg0: i32) -> (i32, i32) {
    %c0_i32 = arith.constant 0 : i32
    %c0_i32_0 = arith.constant 0 : i32
    %c0_i32_1 = arith.constant 0 : i32
    return %c0_i32, %c0_i32_0 : i32, i32
  }
  func.func @transform_3(%arg0: i32) -> (i32, i32) {
    %c0_i32 = arith.constant 0 : i32
    %c0_i32_0 = arith.constant 0 : i32
    %c0_i32_1 = arith.constant 0 : i32
    return %c0_i32, %c0_i32_0 : i32, i32
  }
  func.func @transform_4(%arg0: i32) -> (i32, i32) {
    %c0_i32 = arith.constant 0 : i32
    %c0_i32_0 = arith.constant 0 : i32
    return %arg0, %c0_i32 : i32, i32
  }
  func.func @transform_5(%arg0: i32) -> (i32, i32) {
    %c0_i32 = arith.constant 0 : i32
    %c0_i32_0 = arith.constant 0 : i32
    return %arg0, %c0_i32 : i32, i32
  }
}

</mosaic_0001>

<llo_original>
// kernel: tpu_custom_call.1
$region0: #{tpu_custom_call.1}
  #allocation0 [shape = 'u32[]', space=smem, size = 0x4, offset = 0x4, fixed_abs, tag = 'smem constant byte address 0x4 - core index']
  #allocation1 [shape = 'u32[144,128]{1,0:T(1,128)}', space=vmem, size = 0x12000, scoped, tag = 'internal scratch']
  %s0 = inlined_call_operand.vmem [shape: f32[2,256], index: 0, kind: input, shape index: {}]
  %s1 = inlined_call_operand.hbm [shape: f32[256,128], index: 1, kind: input, shape index: {}]
  %s2 = inlined_call_operand.vmem [shape: f32[1,128], index: 2, kind: input, shape index: {}]
  %s3 = inlined_call_operand.vmem [shape: f32[128,8], index: 3, kind: input, shape index: {}]
  %s4 = inlined_call_operand.hbm [shape: f32[2,32], index: 4, kind: output, shape index: {0}]
  %s5 = inlined_call_operand.hbm [shape: f32[2,8], index: 5, kind: output, shape index: {1}]
  %6 = xla_tuple %s4, %s5
  %s7 = sld [smem:[#allocation0]]
  $region38: #{tpu_custom_call.1} parent=0
    _
  %s9 = ssub.s32 1, %s7
  %s10 = scalar_select 0, %s9, %s7
  $region1: #{tpu_custom_call.1} parent=0
    #allocation2 [shape = 'u8[131072]{0}', space=vmem, size = 0x20000, scoped, tag = 'input window, operand 1, single buffered']
    #allocation3 [shape = 's32[1]{0}', space=sflag, size = 0x4, scoped, tag = 'scoped memory for tpu_custom_call.1']
    #allocation4 [shape = 's32[1]{0}', space=sflag, size = 0x4, scoped, tag = 'scoped memory for tpu_custom_call.1']
    #allocation5 [shape = 'u8[1024]{0}', space=vmem, size = 0x400, scoped, tag = 'output window, operand 0, single buffered']
    #allocation6 [shape = 'u8[1024]{0}', space=vmem, size = 0x400, scoped, tag = 'output window, operand 1, single buffered']
    #allocation7 [shape = 's32[1]{0}', space=sflag, size = 0x4, scoped, tag = 'scoped memory for tpu_custom_call.1']
    %11 = vsyncpa [#allocation3], 0
    %12 = vsyncpa [#allocation4], 0
    %13 = vsyncpa [#allocation7], 0
    // Predicated region
    $region2: #{tpu_custom_call.1} parent=1 // pred_check
      _
    $region3: #{tpu_custom_call.1} parent=1 // pred_check_branch
      %15 = sbr.rel (0) target = $region5
    $region4: #{tpu_custom_call.1} parent=1 // pred_region
      _
    $region5: #{tpu_custom_call.1} parent=1 // pred_fallthru
      _
    // Predicated region
    $region6: #{tpu_custom_call.1} parent=1 // pred_check
      _
    $region7: #{tpu_custom_call.1} parent=1 // pred_check_branch
      %17 = sbr.rel (0) target = $region9
    $region8: #{tpu_custom_call.1} parent=1 // pred_region
      %s19 = ssub.s32 4096, 4096
      %20 = vsyncadd [#allocation3], %s19
      %s21 = sshll.u32 [#allocation2], 4
      %s22 = int_to_ptr.vmem [resolvable:$true] %s21
      %27 = dma.hbm_to_vmem [thread:$0]  %s1, 4096, %s22, [#allocation3], 128, 128, 8
    $region9: #{tpu_custom_call.1} parent=1 // pred_fallthru
      _
    // Predicated region
    $region10: #{tpu_custom_call.1} parent=1 // pred_check
      _
    $region11: #{tpu_custom_call.1} parent=1 // pred_check_branch
      %29 = sbr.rel (0) target = $region13
    $region12: #{tpu_custom_call.1} parent=1 // pred_region
      _
    $region13: #{tpu_custom_call.1} parent=1 // pred_fallthru
      _
    // Predicated region
    $region14: #{tpu_custom_call.1} parent=1 // pred_check
      _
    $region15: #{tpu_custom_call.1} parent=1 // pred_check_branch
      %31 = sbr.rel (0) target = $region17
    $region16: #{tpu_custom_call.1} parent=1 // pred_region
      _
    $region17: #{tpu_custom_call.1} parent=1 // pred_fallthru
      _
    // Predicated region
    $region18: #{tpu_custom_call.1} parent=1 // pred_check
      _
    $region19: #{tpu_custom_call.1} parent=1 // pred_check_branch
      %33 = sbr.rel (0) target = $region21
    $region20: #{tpu_custom_call.1} parent=1 // pred_region
      %34 = dma.done [#allocation3], 4096
    $region21: #{tpu_custom_call.1} parent=1 // pred_fallthru
      _
    %v35 = vld [vmem:[%s0] sm:$0xf]
    %v36 = vld [vmem:[#allocation2] sm:$0xff]
    %v37 = vld [vmem:[#allocation2 + $0x8] sm:$0xff]
    %v38 = vld [vmem:[#allocation2 + $0x10] sm:$0xff]
    %v39 = vld [vmem:[#allocation2 + $0x18] sm:$0xff]
    %v40 = vld [vmem:[#allocation2 + $0x20] sm:$0xff]
    %v41 = vld [vmem:[#allocation2 + $0x28] sm:$0xff]
    %v42 = vld [vmem:[#allocation2 + $0x30] sm:$0xff]
    %v43 = vld [vmem:[#allocation2 + $0x38] sm:$0xff]
    %v44 = vld [vmem:[#allocation2 + $0x40] sm:$0xff]
    %v45 = vld [vmem:[#allocation2 + $0x48] sm:$0xff]
    %v46 = vld [vmem:[#allocation2 + $0x50] sm:$0xff]
    %v47 = vld [vmem:[#allocation2 + $0x58] sm:$0xff]
    %v48 = vld [vmem:[#allocation2 + $0x60] sm:$0xff]
    %v49 = vld [vmem:[#allocation2 + $0x68] sm:$0xff]
    %v50 = vld [vmem:[#allocation2 + $0x70] sm:$0xff]
    %v51 = vld [vmem:[#allocation2 + $0x78] sm:$0xff]
    %v52 = vld [vmem:[#allocation2 + $0x80] sm:$0xff]
    %v53 = vld [vmem:[#allocation2 + $0x88] sm:$0xff]
    %v54 = vld [vmem:[#allocation2 + $0x90] sm:$0xff]
    %v55 = vld [vmem:[#allocation2 + $0x98] sm:$0xff]
    %v56 = vld [vmem:[#allocation2 + $0xa0] sm:$0xff]
    %v57 = vld [vmem:[#allocation2 + $0xa8] sm:$0xff]
    %v58 = vld [vmem:[#allocation2 + $0xb0] sm:$0xff]
    %v59 = vld [vmem:[#allocation2 + $0xb8] sm:$0xff]
    %v60 = vld [vmem:[#allocation2 + $0xc0] sm:$0xff]
    %v61 = vld [vmem:[#allocation2 + $0xc8] sm:$0xff]
    %v62 = vld [vmem:[#allocation2 + $0xd0] sm:$0xff]
    %v63 = vld [vmem:[#allocation2 + $0xd8] sm:$0xff]
    %v64 = vld [vmem:[#allocation2 + $0xe0] sm:$0xff]
    %v65 = vld [vmem:[#allocation2 + $0xe8] sm:$0xff]
    %v66 = vld [vmem:[#allocation2 + $0xf0] sm:$0xff]
    %v67 = vld [vmem:[#allocation2 + $0xf8] sm:$0xff]
    %v68 = vld [vmem:[%s2] sm:$0x1]
    %v70 = vlaneseq
    %v71 = vshrl.u32 %v70, 7
    %v72 = vsub.s32 0, %v71
    %v73 = vrot.slane %v68, %v72
    %v77 = vunpack.c.l.s4 1983009808
    %v78 = vunpack.c.0.s8 %v77
    %v79 = vlaneseq
    %v80 = vshrl.u32 %v79, 7
    %v81 = vsub.s32 %v78, %v80
    %v82 = vrot.slane %v35, %v81
    %v83 = vcombine.high %v82, %v82
    %86 = vmatprep.subr.mxu0 0.0
    %87 = vmatpush1.msra.mxu0 %v36
    %88 = vmatprep.subr.mxu0 0.0
    %89 = vmatpush1.msra.mxu0 %v37
    %90 = vmatprep.subr.mxu0 0.0
    %91 = vmatpush1.msra.mxu0 %v38
    %92 = vmatprep.subr.mxu0 0.0
    %93 = vmatpush1.msra.mxu0 %v39
    %94 = vmatprep.subr.mxu0 0.0
    %95 = vmatpush1.msra.mxu0 %v40
    %96 = vmatprep.subr.mxu0 0.0
    %97 = vmatpush1.msra.mxu0 %v41
    %98 = vmatprep.subr.mxu0 0.0
    %99 = vmatpush1.msra.mxu0 %v42
    %100 = vmatprep.subr.mxu0 0.0
    %101 = vmatpush1.msra.mxu0 %v43
    %102 = vmatprep.subr.mxu0 0.0
    %103 = vmatpush1.msra.mxu0 %v44
    %104 = vmatprep.subr.mxu0 0.0
    %105 = vmatpush1.msra.mxu0 %v45
    %106 = vmatprep.subr.mxu0 0.0
    %107 = vmatpush1.msra.mxu0 %v46
    %108 = vmatprep.subr.mxu0 0.0
    %109 = vmatpush1.msra.mxu0 %v47
    %110 = vmatprep.subr.mxu0 0.0
    %111 = vmatpush1.msra.mxu0 %v48
    %112 = vmatprep.subr.mxu0 0.0
    %113 = vmatpush1.msra.mxu0 %v49
    %114 = vmatprep.subr.mxu0 0.0
    %115 = vmatpush1.msra.mxu0 %v50
    %116 = vmatprep.subr.mxu0 0.0
    %117 = vmatpush1.msra.mxu0 %v51
    %118 = vmatprep.subr.mxu0 0.0
    %119 = vmatpush1.msra.mxu0 %v52
    %120 = vmatprep.subr.mxu0 0.0
    %121 = vmatpush1.msra.mxu0 %v53
    %122 = vmatprep.subr.mxu0 0.0
    %123 = vmatpush1.msra.mxu0 %v54
    %124 = vmatprep.subr.mxu0 0.0
    %125 = vmatpush1.msra.mxu0 %v55
    %126 = vmatprep.subr.mxu0 0.0
    %127 = vmatpush1.msra.mxu0 %v56
    %128 = vmatprep.subr.mxu0 0.0
    %129 = vmatpush1.msra.mxu0 %v57
    %130 = vmatprep.subr.mxu0 0.0
    %131 = vmatpush1.msra.mxu0 %v58
    %132 = vmatprep.subr.mxu0 0.0
    %133 = vmatpush1.msra.mxu0 %v59
    %134 = vmatprep.subr.mxu0 0.0
    %135 = vmatpush1.msra.mxu0 %v60
    %136 = vmatprep.subr.mxu0 0.0
    %137 = vmatpush1.msra.mxu0 %v61
    %138 = vmatprep.subr.mxu0 0.0
    %139 = vmatpush1.msra.mxu0 %v62
    %140 = vmatprep.subr.mxu0 0.0
    %141 = vmatpush1.msra.mxu0 %v63
    %142 = vmatprep.subr.mxu0 0.0
    %143 = vmatpush1.msra.mxu0 %v64
    %144 = vmatprep.subr.mxu0 0.0
    %145 = vmatpush1.msra.mxu0 %v65
    %146 = vmatprep.subr.mxu0 0.0
    %147 = vmatpush1.msra.mxu0 %v66
    %148 = vmatprep.subr.mxu0 0.0
    %149 = vmatpush1.msra.mxu0 %v67
    %150 = vmatprep.mubr.f32.mxu0 %v83
    %151 = vmatmul.mubr.f32.gmra.mrb[0].mxu0 %v82
    %v152 = vpop.f32.mrb[0].mxu0
    %v153 = vadd.f32 %v73, %v152
    %v154 = vpop.f32.mrb[0].mxu0
    %155 = vdwg.mxu0
    %v156 = vtanh.pop %v153
    %v157 = vld [vmem:[%s3] sm:$0xff]
    %v158 = vld [vmem:[%s3 + $0x8] sm:$0xff]
    %v159 = vld [vmem:[%s3 + $0x10] sm:$0xff]
    %v160 = vld [vmem:[%s3 + $0x18] sm:$0xff]
    %v161 = vld [vmem:[%s3 + $0x20] sm:$0xff]
    %v162 = vld [vmem:[%s3 + $0x28] sm:$0xff]
    %v163 = vld [vmem:[%s3 + $0x30] sm:$0xff]
    %v164 = vld [vmem:[%s3 + $0x38] sm:$0xff]
    %v165 = vld [vmem:[%s3 + $0x40] sm:$0xff]
    %v166 = vld [vmem:[%s3 + $0x48] sm:$0xff]
    %v167 = vld [vmem:[%s3 + $0x50] sm:$0xff]
    %v168 = vld [vmem:[%s3 + $0x58] sm:$0xff]
    %v169 = vld [vmem:[%s3 + $0x60] sm:$0xff]
    %v170 = vld [vmem:[%s3 + $0x68] sm:$0xff]
    %v171 = vld [vmem:[%s3 + $0x70] sm:$0xff]
    %v172 = vld [vmem:[%s3 + $0x78] sm:$0xff]
    %173 = vmatprep.subr.mxu0 0.0
    %174 = vmatpush1.msra.mxu0 %v157
    %175 = vmatprep.subr.mxu0 0.0
    %176 = vmatpush1.msra.mxu0 %v158
    %177 = vmatprep.subr.mxu0 0.0
    %178 = vmatpush1.msra.mxu0 %v159
    %179 = vmatprep.subr.mxu0 0.0
    %180 = vmatpush1.msra.mxu0 %v160
    %181 = vmatprep.subr.mxu0 0.0
    %182 = vmatpush1.msra.mxu0 %v161
    %183 = vmatprep.subr.mxu0 0.0
    %184 = vmatpush1.msra.mxu0 %v162
    %185 = vmatprep.subr.mxu0 0.0
    %186 = vmatpush1.msra.mxu0 %v163
    %187 = vmatprep.subr.mxu0 0.0
    %188 = vmatpush1.msra.mxu0 %v164
    %189 = vmatprep.subr.mxu0 0.0
    %190 = vmatpush1.msra.mxu0 %v165
    %191 = vmatprep.subr.mxu0 0.0
    %192 = vmatpush1.msra.mxu0 %v166
    %193 = vmatprep.subr.mxu0 0.0
    %194 = vmatpush1.msra.mxu0 %v167
    %195 = vmatprep.subr.mxu0 0.0
    %196 = vmatpush1.msra.mxu0 %v168
    %197 = vmatprep.subr.mxu0 0.0
    %198 = vmatpush1.msra.mxu0 %v169
    %199 = vmatprep.subr.mxu0 0.0
    %200 = vmatpush1.msra.mxu0 %v170
    %201 = vmatprep.subr.mxu0 0.0
    %202 = vmatpush1.msra.mxu0 %v171
    %203 = vmatprep.subr.mxu0 0.0
    %204 = vmatpush1.msra.mxu0 %v172
    %205 = vmatprep.subr.mxu0 0.0
    %206 = vmatpush1.msra.mxu0 0.0
    %207 = vmatprep.subr.mxu0 0.0
    %208 = vmatpush1.msra.mxu0 0.0
    %209 = vmatprep.subr.mxu0 0.0
    %210 = vmatpush1.msra.mxu0 0.0
    %211 = vmatprep.subr.mxu0 0.0
    %212 = vmatpush1.msra.mxu0 0.0
    %213 = vmatprep.subr.mxu0 0.0
    %214 = vmatpush1.msra.mxu0 0.0
    %215 = vmatprep.subr.mxu0 0.0
    %216 = vmatpush1.msra.mxu0 0.0
    %217 = vmatprep.subr.mxu0 0.0
    %218 = vmatpush1.msra.mxu0 0.0
    %219 = vmatprep.subr.mxu0 0.0
    %220 = vmatpush1.msra.mxu0 0.0
    %221 = vmatprep.subr.mxu0 0.0
    %222 = vmatpush1.msra.mxu0 0.0
    %223 = vmatprep.subr.mxu0 0.0
    %224 = vmatpush1.msra.mxu0 0.0
    %225 = vmatprep.subr.mxu0 0.0
    %226 = vmatpush1.msra.mxu0 0.0
    %227 = vmatprep.subr.mxu0 0.0
    %228 = vmatpush1.msra.mxu0 0.0
    %229 = vmatprep.subr.mxu0 0.0
    %230 = vmatpush1.msra.mxu0 0.0
    %231 = vmatprep.subr.mxu0 0.0
    %232 = vmatpush1.msra.mxu0 0.0
    %233 = vmatprep.subr.mxu0 0.0
    %234 = vmatpush1.msra.mxu0 0.0
    %235 = vmatprep.subr.mxu0 0.0
    %236 = vmatpush1.msra.mxu0 0.0
    %237 = vmatprep.mubr.f32.mxu0 0.0
    %238 = vmatmul.mubr.f32.gmra.mrb[0].mxu0 %v156
    %v239 = vpop.f32.mrb[0].mxu0
    %v240 = vadd.f32 0.0, %v239
    %v241 = vpop.f32.mrb[0].mxu0
    %242 = vdwg.mxu0
    %vm243 = vcmask 58368
    %v244 = vsel %vm243, %v240, -inf
    %245 = vmax.xlane.f32.xlu0 %v244
    %v246 = vpop.xlane.xlu0 %245
    %v247 = vsub.f32 %v240, %v246
    %v248 = vmul.f32 %v247, 1.442695
    %v249 = vpow.pop %v248
    %v250 = vsel %vm243, %v249, 0.0
    %251 = vadd.xlane.f32.xlu0 %v250
    %v252 = vpop.xlane.xlu0 %251
    %v253 = vrcp.pop %v252
    %v254 = vmul.f32 %v252, %v253
    %v255 = vsub.f32 2.0, %v254
    %v256 = vmul.f32 %v253, %v255
    %v257 = vmul.f32 %v249, %v256
    %258 = vst.msk [vmem:[#allocation6] sm:$0x3] %vm243, %v257
    %260 = vset.pattern.permute.xlu0 0
    %261 = vperm.xlu0 %260, %v257
    %v262 = vpop.permute.xlu0 %261
    %v264 = vmul.f32 %v262, %v35
    %265 = vset.pattern.permute.xlu0 1
    %266 = vperm.xlu0 %265, %v257
    %v267 = vpop.permute.xlu0 %266
    %269 = vrot.lane.b32.xlu0 %v82, 96
    %v270 = vpop.permute.xlu0 %269
    %v272 = vmul.f32 %v267, %v270
    %v273 = vadd.f32 %v264, %v272
    %274 = vset.pattern.permute.xlu0 2
    %275 = vperm.xlu0 %274, %v257
    %v276 = vpop.permute.xlu0 %275
    %278 = vrot.lane.b32.xlu0 %v82, 64
    %v279 = vpop.permute.xlu0 %278
    %v281 = vmul.f32 %v276, %v279
    %v282 = vadd.f32 %v273, %v281
    %283 = vset.pattern.permute.xlu0 3
    %284 = vperm.xlu0 %283, %v257
    %v285 = vpop.permute.xlu0 %284
    %287 = vrot.lane.b32.xlu0 %v82, 32
    %v288 = vpop.permute.xlu0 %287
    %v290 = vmul.f32 %v285, %v288
    %v291 = vadd.f32 %v282, %v290
    %292 = vset.pattern.permute.xlu0 4
    %293 = vperm.xlu0 %292, %v257
    %v294 = vpop.permute.xlu0 %293
    %v296 = vmul.f32 %v294, %v83
    %v297 = vadd.f32 %v291, %v296
    %298 = vset.pattern.permute.xlu0 5
    %299 = vperm.xlu0 %298, %v257
    %v300 = vpop.permute.xlu0 %299
    %302 = vrot.lane.b32.xlu0 %v83, 96
    %v303 = vpop.permute.xlu0 %302
    %v305 = vmul.f32 %v300, %v303
    %v306 = vadd.f32 %v297, %v305
    %307 = vset.pattern.permute.xlu0 6
    %308 = vperm.xlu0 %307, %v257
    %v309 = vpop.permute.xlu0 %308
    %311 = vrot.lane.b32.xlu0 %v83, 64
    %v312 = vpop.permute.xlu0 %311
    %v314 = vmul.f32 %v309, %v312
    %v315 = vadd.f32 %v306, %v314
    %316 = vset.pattern.permute.xlu0 7
    %317 = vperm.xlu0 %316, %v257
    %v318 = vpop.permute.xlu0 %317
    %320 = vrot.lane.b32.xlu0 %v83, 32
    %v321 = vpop.permute.xlu0 %320
    %v323 = vmul.f32 %v318, %v321
    %v324 = vadd.f32 %v315, %v323
    %vm325 = vcmask 254976
    %326 = vst.msk [vmem:[#allocation5] sm:$0x3] %vm325, %v324
    // Predicated region
    $region22: #{tpu_custom_call.1} parent=1 // pred_check
      _
    $region23: #{tpu_custom_call.1} parent=1 // pred_check_branch
      %328 = sbr.rel (0) target = $region25
    $region24: #{tpu_custom_call.1} parent=1 // pred_region
      %s330 = ssub.s32 32, 32
      %331 = vsyncadd [#allocation4], %s330
      %s333 = sshll.u32 [#allocation5], 4
      %s334 = int_to_ptr.vmem [resolvable:$true] %s333
      %336 = dma.vmem_to_hbm [thread:$0]  %s334, 32, %s4, [#allocation4]
    $region25: #{tpu_custom_call.1} parent=1 // pred_fallthru
      _
    // Predicated region
    $region26: #{tpu_custom_call.1} parent=1 // pred_check
      _
    $region27: #{tpu_custom_call.1} parent=1 // pred_check_branch
      %338 = sbr.rel (0) target = $region29
    $region28: #{tpu_custom_call.1} parent=1 // pred_region
      %s340 = ssub.s32 32, 32
      %341 = vsyncadd [#allocation7], %s340
      %s343 = sshll.u32 [#allocation6], 4
      %s344 = int_to_ptr.vmem [resolvable:$true] %s343
      %346 = dma.vmem_to_hbm [thread:$0]  %s344, 32, %s5, [#allocation7]
    $region29: #{tpu_custom_call.1} parent=1 // pred_fallthru
      _
    // Predicated region
    $region30: #{tpu_custom_call.1} parent=1 // pred_check
      _
    $region31: #{tpu_custom_call.1} parent=1 // pred_check_branch
      %348 = sbr.rel (0) target = $region33
    $region32: #{tpu_custom_call.1} parent=1 // pred_region
      %349 = dma.done [#allocation4], 32
    $region33: #{tpu_custom_call.1} parent=1 // pred_fallthru
      _
    // Predicated region
    $region34: #{tpu_custom_call.1} parent=1 // pred_check
      _
    $region35: #{tpu_custom_call.1} parent=1 // pred_check_branch
      %351 = sbr.rel (0) target = $region37
    $region36: #{tpu_custom_call.1} parent=1 // pred_region
      %352 = dma.done [#allocation7], 32
    $region37: #{tpu_custom_call.1} parent=1 // pred_fallthru
      _
    %353 = vsyncpa [#allocation3], 1
    %354 = vsyncpa [#allocation4], 1
    %355 = vsyncpa [#allocation7], 1

</llo_original>
